<compile_context>
chip_gen: v7x
topology: tpu7x:2x2x1
jax: 0.10.0
libtpu: 0.0.40
codegen_flags: <defaults>
</compile_context>

<pallas_src>
import functools

import jax
import jax.numpy as jnp
from jax.experimental import pallas as pl
from jax.experimental.pallas import tpu as pltpu

_LANE = 128


def _round_up(x, m):
    return ((x + m - 1) // m) * m


def _round_down(x, m):
    return (x // m) * m


def _mean_last_axis_kernel(x_ref, o_ref, *, inv_cols):
    # x_ref: (TM, cols) tile in VMEM; reduce over lanes (last axis), accumulate
    # in f32 without materializing a widened copy of the whole tile.
    s = jnp.sum(x_ref[...], axis=-1, keepdims=True, dtype=jnp.float32)
    # TODO(synk): optional lane-dense output ((1, TM) row via XLU transpose)
    # would turn the TM/8 masked vst.msk into unmasked vst; modest win since
    # the kernel is HBM-read-bound.
    o_ref[...] = (s * inv_cols).astype(o_ref.dtype)


def _per_pair_budget_bytes():
    """Byte budget for ONE input tile + ONE (lane-padded) output tile.

    Both are double-buffered by the BlockSpec pipeline, so the total VMEM plan
    is ~2x this value.  Measured scaling plateaus past ~4-8 MiB tiles (the
    kernel is pure HBM-read-bound), so the default keeps the whole plan
    comfortably inside every generation's VMEM (v5e/v6e: 128 MiB physical,
    v7x: 64 MiB physical / 32 MiB scoped default).
    """
    budget = 8 << 20
    try:
        phys = pltpu.get_tpu_info().vmem_capacity_bytes
        if phys >= (96 << 20):  # v5e / v6e (128 MiB physical VMEM)
            budget = 12 << 20   # protects the very-wide-row (large H*W) case
    except Exception:
        pass  # conservative default is safe everywhere (incl. v7x)
    return budget


def _choose_row_tile(rows, cols, in_dtype, out_dtype):
    """Pick the row tile TM for a (rows, cols) -> (rows, 1) lane reduction.

    Padding-aware VMEM accounting per row:
      input : round_up(cols, 128) * in_itemsize
      output: 128 * out_itemsize        ((tm, 1) pads to (tm, 128) in VMEM)
    Returns (tm, plan_bytes) where plan_bytes counts both double buffers.
    """
    in_itemsize = jnp.dtype(in_dtype).itemsize
    out_itemsize = jnp.dtype(out_dtype).itemsize
    # Sublane multiple of the narrowest dtype: 8 f32, 16 bf16, 32 int8/fp8.
    sub = max(8, 32 // min(in_itemsize, out_itemsize))

    in_row_bytes = _round_up(cols, _LANE) * in_itemsize
    out_row_bytes = _LANE * out_itemsize

    budget = _per_pair_budget_bytes()
    tm = _round_down(budget // (in_row_bytes + out_row_bytes), sub)

    if tm <= 0:
        # A single sublane group of rows already exceeds the budget (huge H*W).
        # TODO(synk): add a second "arbitrary" cols grid axis with an f32 VMEM
        # accumulator for H*W in the hundreds of thousands; unnecessary for
        # the global-average-pool shapes this Lambda is used for.
        tm = sub

    if rows >= 2 * sub:
        # Guarantee >= 2 grid steps so v7x can shard the "parallel" row axis
        # across both TensorCores (each issuing its own HBM DMAs).
        tm = min(tm, max(sub, _round_down(rows // 2, sub)))

    if tm >= rows:
        tm = rows  # full-extent block: always legal, regardless of alignment
    # else: tm is a multiple of `sub` (>= 8), satisfying the (8, 128) rule.

    tm_padded = _round_up(tm, sub)
    plan_bytes = 2 * (tm_padded * in_row_bytes + tm_padded * out_row_bytes)
    return tm, plan_bytes


def pallas_spatial_mean(x):
    """func(x) = x.mean(dim=[2, 3]) for an NCHW tensor, computed in Pallas."""
    B, C, H, W = x.shape
    rows, cols = B * C, H * W
    x2 = x.reshape(rows, cols)

    tm, plan_bytes = _choose_row_tile(rows, cols, x2.dtype, x2.dtype)
    grid = (pl.cdiv(rows, tm),)

    kernel = functools.partial(_mean_last_axis_kernel, inv_cols=1.0 / float(cols))

    # Explicit scoped-VMEM limit: covers the computed plan + headroom, never
    # below 32 MiB (so v5e's 16 MiB default never gates full-depth pipelining)
    # and never above 48 MiB (so v7x's 64 MiB physical VMEM is never at risk).
    vmem_limit = int(min(max(32 << 20, plan_bytes + (8 << 20)), 48 << 20))

    out = pl.pallas_call(
        kernel,
        out_shape=jax.ShapeDtypeStruct((rows, 1), x.dtype),
        grid_spec=pltpu.PrefetchScalarGridSpec(
            num_scalar_prefetch=0,
            grid=grid,
            in_specs=[pl.BlockSpec((tm, cols), lambda i: (i, 0))],
            out_specs=pl.BlockSpec((tm, 1), lambda i: (i, 0)),
        ),
        compiler_params=pltpu.CompilerParams(
            dimension_semantics=("parallel",),
            vmem_limit_bytes=vmem_limit,
        ),
    )(x2)
    return out.reshape(B, C)


class Lambda:
    """Helper class mirroring the PyTorch Lambda module: forward(x) = func(x)."""

    def __init__(self, func):
        self.func = func

    def __call__(self, x):
        return self.func(x)


if __name__ == "__main__":
    key = jax.random.PRNGKey(0)
    # Small shapes consistent with a conv feature map: NCHW = (2, 4, 16, 16).
    x = jax.random.normal(key, (2, 4, 16, 16), dtype=jnp.float32)

    # Lambda wrapping the Pallas-backed spatial-mean func.
    lam = Lambda(pallas_spatial_mean)

    y = lam(x)
    jax.block_until_ready(y)

    # Reference check against plain JAX (same semantics as torch mean over dims [2,3]).
    y_ref = jnp.mean(x, axis=(2, 3))
    assert y.shape == (2, 4)
    assert jnp.allclose(y, y_ref, atol=1e-5, rtol=1e-5)

    print("KERNEL_OK")
</pallas_src>

<mosaic_0001>
module attributes {stable_mosaic.version = 11 : i64} {
  func.func @_mean_last_axis_kernel(%arg0: i32, %arg1: memref<8x256xf32, #tpu.memory_space<vmem>>, %arg2: memref<8x1xf32, #tpu.memory_space<vmem>>) attributes {dimension_semantics = [#tpu.dimension_semantics<parallel>], iteration_bounds = array<i64: 1>, scalar_prefetch = 0 : i64, scratch_operands = 0 : i64, tpu.core_type = #tpu.core_type<tc>, window_params = [{transform_indices = @transform_0, window_bounds = array<i64: 8, 256>}, {transform_indices = @transform_1, window_bounds = array<i64: 8, 1>}]} {
    %c0 = arith.constant 0 : index
    %c0_0 = arith.constant 0 : index
    %0 = vector.load %arg1[%c0, %c0_0] : memref<8x256xf32, #tpu.memory_space<vmem>>, vector<8x256xf32>
    %cst = arith.constant dense<0.000000e+00> : vector<8xf32>
    %1 = vector.multi_reduction <add>, %0, %cst [1] : vector<8x256xf32> to vector<8xf32>
    %2 = vector.shape_cast %1 : vector<8xf32> to vector<8x1xf32>
    %cst_1 = arith.constant 3.906250e-03 : f32
    %3 = vector.broadcast %cst_1 : f32 to vector<8x1xf32>
    %4 = arith.mulf %2, %3 : vector<8x1xf32>
    %c0_2 = arith.constant 0 : index
    %c0_3 = arith.constant 0 : index
    %5 = vector.load %arg2[%c0_2, %c0_3] : memref<8x1xf32, #tpu.memory_space<vmem>>, vector<8x1xf32>
    tpu.vector_store %arg2[%c0_2, %c0_3], %4 {strides = array<i32>} : memref<8x1xf32, #tpu.memory_space<vmem>>, vector<8x1xf32>,
    return
  }
  func.func @transform_0(%arg0: i32) -> (i32, i32) {
    %c0_i32 = arith.constant 0 : i32
    %c0_i32_0 = arith.constant 0 : i32
    return %arg0, %c0_i32 : i32, i32
  }
  func.func @transform_1(%arg0: i32) -> (i32, i32) {
    %c0_i32 = arith.constant 0 : i32
    %c0_i32_0 = arith.constant 0 : i32
    return %arg0, %c0_i32 : i32, i32
  }
}

</mosaic_0001>

<llo_original>
// kernel: tpu_custom_call.1
$region0: #{tpu_custom_call.1}
  #allocation0 [shape = 'u32[]', space=smem, size = 0x4, offset = 0x4, fixed_abs, tag = 'smem constant byte address 0x4 - core index']
  #allocation1 [shape = 'u32[144,128]{1,0:T(1,128)}', space=vmem, size = 0x12000, scoped, tag = 'internal scratch']
  %s0 = inlined_call_operand.hbm [shape: f32[8,256], index: 0, kind: input, shape index: {}]
  %s1 = inlined_call_operand.vmem [shape: f32[8,1], index: 1, kind: output, shape index: {}]
  %s2 = sld [smem:[#allocation0]]
  $region18: #{tpu_custom_call.1} parent=0
    _
  %s4 = ssub.s32 1, %s2
  %s5 = scalar_select 0, %s4, %s2
  $region1: #{tpu_custom_call.1} parent=0
    #allocation2 [shape = 'u8[8192]{0}', space=vmem, size = 0x2000, scoped, tag = 'input window, operand 0, single buffered']
    #allocation3 [shape = 's32[1]{0}', space=sflag, size = 0x4, scoped, tag = 'scoped memory for tpu_custom_call.1']
    %6 = vsyncpa [#allocation3], 0
    // Predicated region
    $region2: #{tpu_custom_call.1} parent=1 // pred_check
      _
    $region3: #{tpu_custom_call.1} parent=1 // pred_check_branch
      %8 = sbr.rel (0) target = $region5
    $region4: #{tpu_custom_call.1} parent=1 // pred_region
      %s10 = ssub.s32 256, 256
      %11 = vsyncadd [#allocation3], %s10
      %s13 = sshll.u32 [#allocation2], 4
      %s14 = int_to_ptr.vmem [resolvable:$true] %s13
      %16 = dma.hbm_to_vmem [thread:$0]  %s0, 256, %s14, [#allocation3]
    $region5: #{tpu_custom_call.1} parent=1 // pred_fallthru
      _
    // Predicated region
    $region6: #{tpu_custom_call.1} parent=1 // pred_check
      _
    $region7: #{tpu_custom_call.1} parent=1 // pred_check_branch
      %18 = sbr.rel (0) target = $region9
    $region8: #{tpu_custom_call.1} parent=1 // pred_region
      %19 = dma.done [#allocation3], 256
    $region9: #{tpu_custom_call.1} parent=1 // pred_fallthru
      _
    %v20 = vld [vmem:[#allocation2] sm:$0xff]
    %v21 = vld [vmem:[#allocation2 + $0x8] sm:$0xff]
    %v22 = vadd.f32 %v20, %v21
    %23 = vadd.xlane.f32.xlu0 %v22
    %v24 = vpop.xlane.xlu0 %23
    %v25 = vmul.f32 %v24, 0.00390625
    %vm26 = vcmask 7168
    %27 = vst.msk [vmem:[%s1] sm:$0xff] %vm26, %v25
    // Predicated region
    $region10: #{tpu_custom_call.1} parent=1 // pred_check
      _
    $region11: #{tpu_custom_call.1} parent=1 // pred_check_branch
      %29 = sbr.rel (0) target = $region13
    $region12: #{tpu_custom_call.1} parent=1 // pred_region
      _
    $region13: #{tpu_custom_call.1} parent=1 // pred_fallthru
      _
    // Predicated region
    $region14: #{tpu_custom_call.1} parent=1 // pred_check
      _
    $region15: #{tpu_custom_call.1} parent=1 // pred_check_branch
      %31 = sbr.rel (0) target = $region17
    $region16: #{tpu_custom_call.1} parent=1 // pred_region
      _
    $region17: #{tpu_custom_call.1} parent=1 // pred_fallthru
      _
    %32 = vsyncpa [#allocation3], 1

</llo_original>
